<compile_context>
chip_gen: v7x
topology: tpu7x:2x2x1
jax: 0.10.0
libtpu: 0.0.40
codegen_flags: <defaults>
</compile_context>

<pallas_src>
import functools
import math

import jax
import jax.numpy as jnp
from jax import lax
from jax.experimental import pallas as pl
from jax.experimental.pallas import tpu as pltpu


def _pick_tile(n, t, align):
    """Largest multiple-of-`align` divisor of n that is <= t, else full dim."""
    if n <= t:
        return n
    d = (t // align) * align
    while d >= align:
        if n % d == 0:
            return d
        d -= align
    return n  # full dim is always a legal block


# ----------------------------------------------------------------------------
# Tiled linear projection:  y = x @ W + b   (bf16 operands, f32 accumulate)
# ----------------------------------------------------------------------------
def _linear_kernel(x_ref, w_ref, b_ref, o_ref, acc_ref):
    kk = pl.program_id(2)

    @pl.when(kk == 0)
    def _():
        acc_ref[...] = jnp.zeros_like(acc_ref)

    acc_ref[...] += jnp.dot(
        x_ref[...].astype(jnp.bfloat16),
        w_ref[...].astype(jnp.bfloat16),
        preferred_element_type=jnp.float32,
    )

    @pl.when(kk == pl.num_programs(2) - 1)
    def _():
        o_ref[...] = (acc_ref[...] + b_ref[...]).astype(o_ref.dtype)


def _pallas_linear(x2d, w, b2d, *, out_dtype=jnp.float32, tm=256, tn=256, tk=512):
    m, d_in = x2d.shape
    d_out = w.shape[1]
    bm = _pick_tile(m, tm, 16)
    bn = _pick_tile(d_out, tn, 128)
    bk = _pick_tile(d_in, tk, 128)
    grid = (m // bm, d_out // bn, d_in // bk)
    return pl.pallas_call(
        _linear_kernel,
        out_shape=jax.ShapeDtypeStruct((m, d_out), out_dtype),
        grid=grid,
        in_specs=[
            pl.BlockSpec((bm, bk), lambda i, j, k: (i, k)),
            pl.BlockSpec((bk, bn), lambda i, j, k: (k, j)),
            pl.BlockSpec((1, bn), lambda i, j, k: (0, j)),
        ],
        out_specs=pl.BlockSpec((bm, bn), lambda i, j, k: (i, j)),
        scratch_shapes=[pltpu.VMEM((bm, bn), jnp.float32)],
        compiler_params=pltpu.CompilerParams(
            dimension_semantics=("parallel", "parallel", "arbitrary")
        ),
    )(x2d, w, b2d)


# ----------------------------------------------------------------------------
# Attention core: flash-style online softmax over nk tiles.
#   Grid (batch, q-tile, nk-tile); heads stay folded in the lane axis and are
#   processed as lane slices inside the kernel (no transposes anywhere).
# ----------------------------------------------------------------------------
def _attn_kernel(q_ref, k_ref, v_ref, wg_ref, o_ref, m_ref, l_ref, acc_ref,
                 *, h, d_k, d_v):
    # q: (tq, h*d_k) bf16, k: (tk, h*d_k) bf16, v: (tk, h*d_v) bf16,
    # wg: (h, tq, tk) bf16, o: (tq, h*d_v) bf16
    # scratch: m,l: (tq, h) f32 ; acc: (tq, h*d_v) f32
    j = pl.program_id(2)

    @pl.when(j == 0)
    def _():
        m_ref[...] = jnp.full_like(m_ref, -jnp.inf)
        l_ref[...] = jnp.zeros_like(l_ref)
        acc_ref[...] = jnp.zeros_like(acc_ref)

    for hh in range(h):
        # Read only the lanes this head needs, straight from the refs.
        qh = q_ref[:, hh * d_k:(hh + 1) * d_k]          # (tq, d_k) bf16
        kh = k_ref[:, hh * d_k:(hh + 1) * d_k]          # (tk, d_k) bf16
        vh = v_ref[:, hh * d_v:(hh + 1) * d_v]          # (tk, d_v) bf16

        # scores = (q * 1/sqrt(d_k)) @ k^T  (scale already folded into fc_q)
        s = lax.dot_general(
            qh, kh,
            dimension_numbers=(((1,), (1,)), ((), ())),
            preferred_element_type=jnp.float32,
        )
        s = s - wg_ref[hh].astype(jnp.float32)           # w_mn = att - w_g

        m_prev = m_ref[:, hh:hh + 1]
        m_new = jnp.maximum(m_prev, jnp.max(s, axis=-1, keepdims=True))
        alpha = jnp.exp(m_prev - m_new)
        p = jnp.exp(s - m_new)

        l_ref[:, hh:hh + 1] = (
            alpha * l_ref[:, hh:hh + 1] + jnp.sum(p, axis=-1, keepdims=True)
        )
        acc_ref[:, hh * d_v:(hh + 1) * d_v] = (
            alpha * acc_ref[:, hh * d_v:(hh + 1) * d_v]
            + jnp.dot(p.astype(jnp.bfloat16), vh,
                      preferred_element_type=jnp.float32)
        )
        m_ref[:, hh:hh + 1] = m_new

    # TODO(synk): training-mode dropout on the attention weights is not
    # applied (eval-mode identity), matching model.eval() semantics.

    @pl.when(j == pl.num_programs(2) - 1)
    def _():
        for hh in range(h):
            # Exact divide for the one-time final normalization; each head is
            # stored into its lane slice as it finishes (no concatenate).
            o_ref[:, hh * d_v:(hh + 1) * d_v] = (
                acc_ref[:, hh * d_v:(hh + 1) * d_v] / l_ref[:, hh:hh + 1]
            ).astype(o_ref.dtype)


def _pallas_mhsa_core(q, k, v, w_g, *, d_k, d_v, h, tq=128, tk=512):
    # q: (B, nq, h*d_k), k: (B, nk, h*d_k), v: (B, nk, h*d_v), all bf16
    # w_g: (B, h, nq, nk) bf16  ->  (B, nq, h*d_v) bf16
    b_s, nq, _ = q.shape
    nk = k.shape[1]
    tq = _pick_tile(nq, tq, 16)
    tk = _pick_tile(nk, tk, 16)
    grid = (b_s, nq // tq, nk // tk)

    kernel = functools.partial(_attn_kernel, h=h, d_k=d_k, d_v=d_v)

    flops = 2 * b_s * h * nq * nk * (d_k + d_v) + 6 * b_s * h * nq * nk
    bytes_accessed = 2 * (q.size + k.size + v.size + w_g.size
                          + b_s * nq * h * d_v)

    return pl.pallas_call(
        kernel,
        out_shape=jax.ShapeDtypeStruct((b_s, nq, h * d_v), jnp.bfloat16),
        grid=grid,
        in_specs=[
            pl.BlockSpec((None, tq, h * d_k), lambda b, i, j: (b, i, 0)),
            pl.BlockSpec((None, tk, h * d_k), lambda b, i, j: (b, j, 0)),
            pl.BlockSpec((None, tk, h * d_v), lambda b, i, j: (b, j, 0)),
            pl.BlockSpec((None, h, tq, tk), lambda b, i, j: (b, 0, i, j)),
        ],
        out_specs=pl.BlockSpec((None, tq, h * d_v), lambda b, i, j: (b, i, 0)),
        scratch_shapes=[
            pltpu.VMEM((tq, h), jnp.float32),          # running max per head
            pltpu.VMEM((tq, h), jnp.float32),          # running sum per head
            pltpu.VMEM((tq, h * d_v), jnp.float32),    # running accumulator
        ],
        compiler_params=pltpu.CompilerParams(
            dimension_semantics=("parallel", "parallel", "arbitrary")
        ),
        cost_estimate=pl.CostEstimate(
            flops=flops,
            transcendentals=b_s * h * nq * nk,
            bytes_accessed=bytes_accessed,
        ),
    )(q, k, v, w_g)


# ----------------------------------------------------------------------------
# Parameter init (deterministic, matches PyTorch __init__ shapes)
# ----------------------------------------------------------------------------
def _xavier_uniform(key, fan_in, fan_out):
    bound = math.sqrt(6.0 / (fan_in + fan_out))
    # stored as (d_in, d_out) so the kernels compute x @ W
    return jax.random.uniform(
        key, (fan_in, fan_out), dtype=jnp.float32, minval=-bound, maxval=bound
    )


def init_params(key, d_model, d_k, d_v, h):
    k1, k2, k3, k4 = jax.random.split(key, 4)
    return {
        "wq": _xavier_uniform(k1, d_model, h * d_k),
        "bq": jnp.zeros((1, h * d_k), jnp.float32),
        "wk": _xavier_uniform(k2, d_model, h * d_k),
        "bk": jnp.zeros((1, h * d_k), jnp.float32),
        "wv": _xavier_uniform(k3, d_model, h * d_v),
        "bv": jnp.zeros((1, h * d_v), jnp.float32),
        "wo": _xavier_uniform(k4, h * d_v, d_model),
        "bo": jnp.zeros((1, d_model), jnp.float32),
    }


# ----------------------------------------------------------------------------
# Forward pass — heads stay folded in the lane axis, no XLA transposes.
# ----------------------------------------------------------------------------
def scaled_dot_product_geometry_attention(
    params, queries, keys, values, box_relation_embed_matrix, *, d_k, d_v, h
):
    b_s, nq, d_model = queries.shape
    nk = keys.shape[1]
    scale = 1.0 / math.sqrt(d_k)

    # Fold 1/sqrt(d_k) into the Q projection (tiny one-time op on the weights)
    # so the attention kernel never multiplies the (tq, nk) score tile.
    wq_s = params["wq"] * scale
    bq_s = params["bq"] * scale

    if queries is keys is values:
        # Fused QKV projection: the activation is streamed from HBM once.
        w_qkv = jnp.concatenate([wq_s, params["wk"], params["wv"]], axis=1)
        b_qkv = jnp.concatenate([bq_s, params["bk"], params["bv"]], axis=1)
        qkv = _pallas_linear(queries.reshape(b_s * nq, d_model), w_qkv, b_qkv,
                             out_dtype=jnp.bfloat16)
        q = qkv[:, :h * d_k]
        k = qkv[:, h * d_k:2 * h * d_k]
        v = qkv[:, 2 * h * d_k:]
    else:
        q = _pallas_linear(queries.reshape(b_s * nq, d_model), wq_s, bq_s,
                           out_dtype=jnp.bfloat16)
        k = _pallas_linear(keys.reshape(b_s * nk, d_model), params["wk"],
                           params["bk"], out_dtype=jnp.bfloat16)
        v = _pallas_linear(values.reshape(b_s * nk, d_model), params["wv"],
                           params["bv"], out_dtype=jnp.bfloat16)

    q = q.reshape(b_s, nq, h * d_k)
    k = k.reshape(b_s, nk, h * d_k)
    v = v.reshape(b_s, nk, h * d_v)
    w_g = box_relation_embed_matrix.astype(jnp.bfloat16)  # halve its HBM/VMEM

    out = _pallas_mhsa_core(q, k, v, w_g, d_k=d_k, d_v=d_v, h=h)  # (B,nq,h*d_v)

    out = _pallas_linear(out.reshape(b_s * nq, h * d_v), params["wo"],
                         params["bo"], out_dtype=jnp.float32)
    return out.reshape(b_s, nq, d_model)


# ----------------------------------------------------------------------------
# Pure-JAX f32 reference for a correctness check
# ----------------------------------------------------------------------------
def _reference_forward(params, queries, keys, values, w_g, *, d_k, d_v, h):
    b_s, nq, d_model = queries.shape
    nk = keys.shape[1]
    q = (queries @ params["wq"] + params["bq"]).reshape(b_s, nq, h, d_k).transpose(0, 2, 1, 3)
    k = (keys @ params["wk"] + params["bk"]).reshape(b_s, nk, h, d_k).transpose(0, 2, 1, 3)
    v = (values @ params["wv"] + params["bv"]).reshape(b_s, nk, h, d_v).transpose(0, 2, 1, 3)
    att = jnp.einsum("bhqd,bhkd->bhqk", q, k) / math.sqrt(d_k)
    w_mn = jax.nn.softmax(att - w_g, axis=-1)
    out = jnp.einsum("bhqk,bhkd->bhqd", w_mn, v)
    out = out.transpose(0, 2, 1, 3).reshape(b_s, nq, h * d_v)
    return out @ params["wo"] + params["bo"]


if __name__ == "__main__":
    # Small shapes consistent with the module's forward
    b_s, nq, nk = 2, 8, 8
    d_model, d_k, d_v, h = 32, 16, 16, 4

    key = jax.random.PRNGKey(0)
    kp, kx, kq, kk, kv, kg = jax.random.split(key, 6)

    params = init_params(kp, d_model, d_k, d_v, h)
    box_relation_embed_matrix = jax.random.normal(kg, (b_s, h, nq, nk), jnp.float32)

    # Tolerance accounts for bf16 MXU operands + bf16 w_g vs the f32 reference.
    ATOL = RTOL = 6e-2

    # --- self-attention path (fused QKV projection) ---
    x = jax.random.normal(kx, (b_s, nq, d_model), dtype=jnp.float32)
    out_self = scaled_dot_product_geometry_attention(
        params, x, x, x, box_relation_embed_matrix, d_k=d_k, d_v=d_v, h=h)
    out_self = jax.block_until_ready(out_self)
    ref_self = _reference_forward(
        params, x, x, x, box_relation_embed_matrix, d_k=d_k, d_v=d_v, h=h)
    assert out_self.shape == (b_s, nq, d_model)
    err = jnp.max(jnp.abs(out_self - ref_self))
    assert jnp.allclose(out_self, ref_self, atol=ATOL, rtol=RTOL), \
        f"self-attn mismatch vs ref (max |err|={err})"

    # --- cross-attention path (separate projections) ---
    queries = jax.random.normal(kq, (b_s, nq, d_model), dtype=jnp.float32)
    keys = jax.random.normal(kk, (b_s, nk, d_model), dtype=jnp.float32)
    values = jax.random.normal(kv, (b_s, nk, d_model), dtype=jnp.float32)
    out = scaled_dot_product_geometry_attention(
        params, queries, keys, values, box_relation_embed_matrix,
        d_k=d_k, d_v=d_v, h=h)
    out = jax.block_until_ready(out)
    ref = _reference_forward(
        params, queries, keys, values, box_relation_embed_matrix,
        d_k=d_k, d_v=d_v, h=h)
    assert out.shape == (b_s, nq, d_model)
    err = jnp.max(jnp.abs(out - ref))
    assert jnp.allclose(out, ref, atol=ATOL, rtol=RTOL), \
        f"cross-attn mismatch vs ref (max |err|={err})"

    print("KERNEL_OK")
</pallas_src>

<mosaic_0001>
module attributes {stable_mosaic.version = 11 : i64} {
  func.func @_linear_kernel(%arg0: i32, %arg1: i32, %arg2: i32, %arg3: memref<16x32xf32, #tpu.memory_space<vmem>>, %arg4: memref<32x192xf32, #tpu.memory_space<vmem>>, %arg5: memref<1x192xf32, #tpu.memory_space<vmem>>, %arg6: memref<16x192xbf16, #tpu.memory_space<vmem>>, %arg7: memref<16x192xf32, #tpu.memory_space<vmem>>) attributes {dimension_semantics = [#tpu.dimension_semantics<parallel>, #tpu.dimension_semantics<parallel>, #tpu.dimension_semantics<arbitrary>], iteration_bounds = array<i64: 1, 1, 1>, scalar_prefetch = 0 : i64, scratch_operands = 1 : i64, tpu.core_type = #tpu.core_type<tc>, window_params = [{transform_indices = @transform_0, window_bounds = array<i64: 16, 32>}, {transform_indices = @transform_1, window_bounds = array<i64: 32, 192>}, {transform_indices = @transform_2, window_bounds = array<i64: 1, 192>}, {transform_indices = @transform_3, window_bounds = array<i64: 16, 192>}]} {
    %c0_i32 = arith.constant 0 : i32
    %0 = arith.cmpi eq, %arg2, %c0_i32 : i32
    %1 = arith.extui %0 : i1 to i32
    %c0_i32_0 = arith.constant 0 : i32
    %2 = arith.cmpi ne, %1, %c0_i32_0 : i32
    scf.if %2 {
      %cst_10 = arith.constant 0.000000e+00 : f32
      %14 = vector.broadcast %cst_10 : f32 to vector<16x192xf32>
      %c0_11 = arith.constant 0 : index
      %c0_12 = arith.constant 0 : index
      %15 = vector.load %arg7[%c0_11, %c0_12] : memref<16x192xf32, #tpu.memory_space<vmem>>, vector<16x192xf32>
      tpu.vector_store %arg7[%c0_11, %c0_12], %14 {strides = array<i32>} : memref<16x192xf32, #tpu.memory_space<vmem>>, vector<16x192xf32>,
    } else {
    }
    %c0 = arith.constant 0 : index
    %c0_1 = arith.constant 0 : index
    %3 = vector.load %arg7[%c0, %c0_1] : memref<16x192xf32, #tpu.memory_space<vmem>>, vector<16x192xf32>
    %c0_2 = arith.constant 0 : index
    %c0_3 = arith.constant 0 : index
    %4 = vector.load %arg3[%c0_2, %c0_3] : memref<16x32xf32, #tpu.memory_space<vmem>>, vector<16x32xf32>
    %5 = arith.truncf %4 : vector<16x32xf32> to vector<16x32xbf16>
    %c0_4 = arith.constant 0 : index
    %c0_5 = arith.constant 0 : index
    %6 = vector.load %arg4[%c0_4, %c0_5] : memref<32x192xf32, #tpu.memory_space<vmem>>, vector<32x192xf32>
    %7 = arith.truncf %6 : vector<32x192xf32> to vector<32x192xbf16>
    %cst = arith.constant dense<0.000000e+00> : vector<16x192xf32>
    %8 = tpu.matmul %5, %7, %cst {dimension_numbers = #tpu.dot_dimension_numbers<[1], [0], [0], [1], [0, 0, 1, 1], [], []>} : vector<16x32xbf16>, vector<32x192xbf16>, vector<16x192xf32> -> vector<16x192xf32>
    %9 = arith.addf %3, %8 : vector<16x192xf32>
    %c0_6 = arith.constant 0 : index
    %c0_7 = arith.constant 0 : index
    %10 = vector.load %arg7[%c0_6, %c0_7] : memref<16x192xf32, #tpu.memory_space<vmem>>, vector<16x192xf32>
    tpu.vector_store %arg7[%c0_6, %c0_7], %9 {strides = array<i32>} : memref<16x192xf32, #tpu.memory_space<vmem>>, vector<16x192xf32>,
    %c0_i32_8 = arith.constant 0 : i32
    %11 = arith.cmpi eq, %arg2, %c0_i32_8 : i32
    %12 = arith.extui %11 : i1 to i32
    %c0_i32_9 = arith.constant 0 : i32
    %13 = arith.cmpi ne, %12, %c0_i32_9 : i32
    scf.if %13 {
      %c0_10 = arith.constant 0 : index
      %c0_11 = arith.constant 0 : index
      %14 = vector.load %arg7[%c0_10, %c0_11] : memref<16x192xf32, #tpu.memory_space<vmem>>, vector<16x192xf32>
      %c0_12 = arith.constant 0 : index
      %c0_13 = arith.constant 0 : index
      %15 = vector.load %arg5[%c0_12, %c0_13] : memref<1x192xf32, #tpu.memory_space<vmem>>, vector<1x192xf32>
      %16 = vector.broadcast %15 : vector<1x192xf32> to vector<16x192xf32>
      %17 = arith.addf %14, %16 : vector<16x192xf32>
      %18 = arith.truncf %17 : vector<16x192xf32> to vector<16x192xbf16>
      %c0_14 = arith.constant 0 : index
      %c0_15 = arith.constant 0 : index
      %19 = vector.load %arg6[%c0_14, %c0_15] : memref<16x192xbf16, #tpu.memory_space<vmem>>, vector<16x192xbf16>
      tpu.vector_store %arg6[%c0_14, %c0_15], %18 {strides = array<i32>} : memref<16x192xbf16, #tpu.memory_space<vmem>>, vector<16x192xbf16>,
    } else {
    }
    return
  }
  func.func @transform_0(%arg0: i32, %arg1: i32, %arg2: i32) -> (i32, i32) {
    %c0_i32 = arith.constant 0 : i32
    return %arg0, %arg2 : i32, i32
  }
  func.func @transform_1(%arg0: i32, %arg1: i32, %arg2: i32) -> (i32, i32) {
    %c0_i32 = arith.constant 0 : i32
    return %arg2, %arg1 : i32, i32
  }
  func.func @transform_2(%arg0: i32, %arg1: i32, %arg2: i32) -> (i32, i32) {
    %c0_i32 = arith.constant 0 : i32
    %c0_i32_0 = arith.constant 0 : i32
    return %c0_i32, %arg1 : i32, i32
  }
  func.func @transform_3(%arg0: i32, %arg1: i32, %arg2: i32) -> (i32, i32) {
    %c0_i32 = arith.constant 0 : i32
    return %arg0, %arg1 : i32, i32
  }
}

</mosaic_0001>

<llo_original>
// kernel: tpu_custom_call.1
$region0: #{tpu_custom_call.1}
  #allocation0 [shape = 'u32[]', space=smem, size = 0x4, offset = 0x4, fixed_abs, tag = 'smem constant byte address 0x4 - core index']
  #allocation1 [shape = 'u32[144,128]{1,0:T(1,128)}', space=vmem, size = 0x12000, scoped, tag = 'internal scratch']
  #allocation2 [shape = 'f32[16,192]{1,0:T(8,128)}', space=vmem, size = 0x4000, scoped, tag = 'scratch operand']
  %s0 = inlined_call_operand.hbm [shape: f32[16,32], index: 0, kind: input, shape index: {}]
  %s1 = inlined_call_operand.hbm [shape: f32[32,192], index: 1, kind: input, shape index: {}]
  %s2 = inlined_call_operand.vmem [shape: f32[1,192], index: 2, kind: input, shape index: {}]
  %s3 = inlined_call_operand.hbm [shape: bf16[16,192], index: 3, kind: output, shape index: {}]
  %s4 = sld [smem:[#allocation0]]
  $region38: #{tpu_custom_call.1} parent=0
    _
  %s6 = ssub.s32 1, %s4
  %s7 = scalar_select 0, %s6, %s4
  $region1: #{tpu_custom_call.1} parent=0
    #allocation3 [shape = 'u8[8192]{0}', space=vmem, size = 0x2000, scoped, tag = 'input window, operand 0, single buffered']
    #allocation4 [shape = 's32[1]{0}', space=sflag, size = 0x4, scoped, tag = 'scoped memory for tpu_custom_call.1']
    #allocation5 [shape = 's32[1]{0}', space=sflag, size = 0x4, scoped, tag = 'scoped memory for tpu_custom_call.1']
    #allocation6 [shape = 'u8[32768]{0}', space=vmem, size = 0x8000, scoped, tag = 'input window, operand 1, single buffered']
    #allocation7 [shape = 's32[1]{0}', space=sflag, size = 0x4, scoped, tag = 'scoped memory for tpu_custom_call.1']
    #allocation8 [shape = 'u8[8192]{0}', space=vmem, size = 0x2000, scoped, tag = 'output window, operand 0, single buffered']
    %8 = vsyncpa [#allocation4], 0
    %9 = vsyncpa [#allocation7], 0
    %10 = vsyncpa [#allocation5], 0
    // Predicated region
    $region2: #{tpu_custom_call.1} parent=1 // pred_check
      _
    $region3: #{tpu_custom_call.1} parent=1 // pred_check_branch
      %12 = sbr.rel (0) target = $region5
    $region4: #{tpu_custom_call.1} parent=1 // pred_region
      %s14 = ssub.s32 256, 256
      %15 = vsyncadd [#allocation4], %s14
      %s16 = sshll.u32 [#allocation3], 4
      %s17 = int_to_ptr.vmem [resolvable:$true] %s16
      %22 = dma.hbm_to_vmem [thread:$0]  %s0, 256, %s17, [#allocation4], 128, 128, 8
    $region5: #{tpu_custom_call.1} parent=1 // pred_fallthru
      _
    // Predicated region
    $region6: #{tpu_custom_call.1} parent=1 // pred_check
      _
    $region7: #{tpu_custom_call.1} parent=1 // pred_check_branch
      %24 = sbr.rel (0) target = $region9
    $region8: #{tpu_custom_call.1} parent=1 // pred_region
      %s26 = ssub.s32 1024, 1024
      %27 = vsyncadd [#allocation7], %s26
      %s28 = sshll.u32 [#allocation6], 4
      %s29 = int_to_ptr.vmem [resolvable:$true] %s28
      %34 = dma.hbm_to_vmem [thread:$0]  %s1, 1024, %s29, [#allocation7], 256, 256, 16
    $region9: #{tpu_custom_call.1} parent=1 // pred_fallthru
      _
    // Predicated region
    $region10: #{tpu_custom_call.1} parent=1 // pred_check
      _
    $region11: #{tpu_custom_call.1} parent=1 // pred_check_branch
      %36 = sbr.rel (0) target = $region13
    $region12: #{tpu_custom_call.1} parent=1 // pred_region
      _
    $region13: #{tpu_custom_call.1} parent=1 // pred_fallthru
      _
    // Predicated region
    $region14: #{tpu_custom_call.1} parent=1 // pred_check
      _
    $region15: #{tpu_custom_call.1} parent=1 // pred_check_branch
      %38 = sbr.rel (0) target = $region17
    $region16: #{tpu_custom_call.1} parent=1 // pred_region
      %39 = dma.done [#allocation4], 256
    $region17: #{tpu_custom_call.1} parent=1 // pred_fallthru
      _
    // Predicated region
    $region18: #{tpu_custom_call.1} parent=1 // pred_check
      _
    $region19: #{tpu_custom_call.1} parent=1 // pred_check_branch
      %41 = sbr.rel (0) target = $region21
    $region20: #{tpu_custom_call.1} parent=1 // pred_region
      %42 = dma.done [#allocation7], 1024
    $region21: #{tpu_custom_call.1} parent=1 // pred_fallthru
      _
    %p44 = scmp.eq.s32.totalorder 0, 0
    // Predicated region
    $region22: #{tpu_custom_call.1} parent=1 // pred_check
      %p45 = pneg %p44
    $region23: #{tpu_custom_call.1} parent=1 // pred_check_branch
      %47 = sbr.rel (%p45) target = $region25
    $region24: #{tpu_custom_call.1} parent=1 // pred_region
      %48 = vst [vmem:[#allocation2] sm:$0xff] 0.0
      %vm49 = vcmask 523264
      %50 = vst.msk [vmem:[#allocation2 + $0x8] sm:$0xff] %vm49, 0.0
      %51 = vst [vmem:[#allocation2 + $0x10] sm:$0xff] 0.0
      %52 = vst.msk [vmem:[#allocation2 + $0x18] sm:$0xff] %vm49, 0.0
    $region25: #{tpu_custom_call.1} parent=1 // pred_fallthru
      _
    %v53 = vld [vmem:[#allocation2] sm:$0xff]
    %v54 = vld [vmem:[#allocation2 + $0x8] sm:$0xff]
    %v55 = vld [vmem:[#allocation2 + $0x10] sm:$0xff]
    %v56 = vld [vmem:[#allocation2 + $0x18] sm:$0xff]
    %v57 = vld [vmem:[#allocation3] sm:$0xff]
    %v58 = vld [vmem:[#allocation3 + $0x8] sm:$0xff]
    %v59 = vpack.c.bf16 %v58, %v57
    %v60 = vld [vmem:[#allocation6] sm:$0xff]
    %v61 = vld [vmem:[#allocation6 + $0x8] sm:$0xff]
    %v62 = vld [vmem:[#allocation6 + $0x10] sm:$0xff]
    %v63 = vld [vmem:[#allocation6 + $0x18] sm:$0xff]
    %v64 = vld [vmem:[#allocation6 + $0x20] sm:$0xff]
    %v65 = vld [vmem:[#allocation6 + $0x28] sm:$0xff]
    %v66 = vld [vmem:[#allocation6 + $0x30] sm:$0xff]
    %v67 = vld [vmem:[#allocation6 + $0x38] sm:$0xff]
    %v68 = vpack.c.bf16 %v62, %v60
    %v69 = vpack.c.bf16 %v63, %v61
    %v70 = vpack.c.bf16 %v66, %v64
    %v71 = vpack.c.bf16 %v67, %v65
    %vm72 = vcmask 261120
    %v74 = vsel %vm72, %v59, 0
    %76 = vmatprep.subr.bf16.mxu0 %v69
    %77 = vmatpush1.bf16.msra.mxu0 %v68
    %78 = vmatprep.subr.bf16.mxu0 %v71
    %79 = vmatpush1.bf16.msra.mxu0 %v70
    %80 = vmatprep.subr.bf16.mxu0 0
    %81 = vmatpush1.bf16.msra.mxu0 0
    %82 = vmatprep.subr.bf16.mxu0 0
    %83 = vmatpush1.bf16.msra.mxu0 0
    %84 = vmatprep.subr.bf16.mxu0 0
    %85 = vmatpush1.bf16.msra.mxu0 0
    %86 = vmatprep.subr.bf16.mxu0 0
    %87 = vmatpush1.bf16.msra.mxu0 0
    %88 = vmatprep.subr.bf16.mxu0 0
    %89 = vmatpush1.bf16.msra.mxu0 0
    %90 = vmatprep.subr.bf16.mxu0 0
    %91 = vmatpush1.bf16.msra.mxu0 0
    %92 = vmatprep.subr.bf16.mxu0 0
    %93 = vmatpush1.bf16.msra.mxu0 0
    %94 = vmatprep.subr.bf16.mxu0 0
    %95 = vmatpush1.bf16.msra.mxu0 0
    %96 = vmatprep.subr.bf16.mxu0 0
    %97 = vmatpush1.bf16.msra.mxu0 0
    %98 = vmatprep.subr.bf16.mxu0 0
    %99 = vmatpush1.bf16.msra.mxu0 0
    %100 = vmatprep.subr.bf16.mxu0 0
    %101 = vmatpush1.bf16.msra.mxu0 0
    %102 = vmatprep.subr.bf16.mxu0 0
    %103 = vmatpush1.bf16.msra.mxu0 0
    %104 = vmatprep.subr.bf16.mxu0 0
    %105 = vmatpush1.bf16.msra.mxu0 0
    %106 = vmatprep.subr.bf16.mxu0 0
    %107 = vmatpush1.bf16.msra.mxu0 0
    %108 = vmatprep.mubr.bf16.mxu0 0
    %109 = vmatmul.mubr.bf16.gmra.mrb[0].mxu0 %v74
    %v110 = vpop.f32.mrb[0].mxu0
    %v111 = vadd.f32 0.0, %v110
    %v112 = vpop.f32.mrb[0].mxu0
    %v113 = vadd.f32 0.0, %v112
    %v114 = vpop.f32.mrb[0].mxu0
    %v115 = vadd.f32 0.0, %v114
    %v116 = vpop.f32.mrb[0].mxu0
    %v117 = vadd.f32 0.0, %v116
    %118 = vdwg.mxu0
    %v119 = vadd.f32 %v53, %v111
    %v120 = vadd.f32 %v54, %v113
    %v121 = vadd.f32 %v55, %v115
    %v122 = vadd.f32 %v56, %v117
    %123 = vst [vmem:[#allocation2] sm:$0xff] %v119
    %vm124 = vcmask 523264
    %125 = vst.msk [vmem:[#allocation2 + $0x8] sm:$0xff] %vm124, %v120
    %126 = vst [vmem:[#allocation2 + $0x10] sm:$0xff] %v121
    %127 = vst.msk [vmem:[#allocation2 + $0x18] sm:$0xff] %vm124, %v122
    // Predicated region
    $region26: #{tpu_custom_call.1} parent=1 // pred_check
      %p128 = pneg %p44
    $region27: #{tpu_custom_call.1} parent=1 // pred_check_branch
      %130 = sbr.rel (%p128) target = $region29
    $region28: #{tpu_custom_call.1} parent=1 // pred_region
      %v131 = vld [vmem:[#allocation2] sm:$0xff]
      %v132 = vld [vmem:[#allocation2 + $0x8] sm:$0xff]
      %v133 = vld [vmem:[#allocation2 + $0x10] sm:$0xff]
      %v134 = vld [vmem:[#allocation2 + $0x18] sm:$0xff]
      %v135 = vld [vmem:[%s2] sm:$0x3]
      %v137 = vlaneseq
      %v138 = vshrl.u32 %v137, 7
      %v139 = vsub.s32 0, %v138
      %v140 = vrot.slane %v135, %v139
      %v141 = vlaneseq
      %v142 = vshrl.u32 %v141, 7
      %v143 = vsub.s32 1, %v142
      %v144 = vrot.slane %v135, %v143
      %v147 = vadd.f32 %v131, %v140
      %v148 = vadd.f32 %v132, %v144
      %v149 = vadd.f32 %v133, %v140
      %v150 = vadd.f32 %v134, %v144
      %v151 = vpack.c.bf16 %v149, %v147
      %v152 = vpack.c.bf16 %v150, %v148
      %v155 = vunpack.c.l.b16 %v151
      %v156 = vunpack.c.l.b16 %v152
      %v157 = vunpack.c.h.b16 %v151
      %v158 = vunpack.c.h.b16 %v152
      %v159 = vpack.c.b16 %v156, %v155
      %v160 = vpack.c.b16 %v158, %v157
      %vm163 = vcmask 1043456
      %vm164 = vcmask 523268
      %vm165 = vmor %vm164, %vm163
      %166 = vst.msk [vmem:[#allocation8] sm:$0xff] %vm165, %v159
      %167 = vst.msk [vmem:[#allocation8 + $0x8] sm:$0xff] %vm165, %v160
    $region29: #{tpu_custom_call.1} parent=1 // pred_fallthru
      _
    // Predicated region
    $region30: #{tpu_custom_call.1} parent=1 // pred_check
      _
    $region31: #{tpu_custom_call.1} parent=1 // pred_check_branch
      %169 = sbr.rel (0) target = $region33
    $region32: #{tpu_custom_call.1} parent=1 // pred_region
      %s171 = ssub.s32 256, 256
      %172 = vsyncadd [#allocation5], %s171
      %s173 = sshll.u32 [#allocation8], 4
      %s174 = int_to_ptr.vmem [resolvable:$true] %s173
      %179 = dma.vmem_to_hbm [thread:$0]  %s174, 256, %s3, [#allocation5], 128, 128, 8
    $region33: #{tpu_custom_call.1} parent=1 // pred_fallthru
      _
    // Predicated region
    $region34: #{tpu_custom_call.1} parent=1 // pred_check
      _
    $region35: #{tpu_custom_call.1} parent=1 // pred_check_branch
      %181 = sbr.rel (0) target = $region37
    $region36: #{tpu_custom_call.1} parent=1 // pred_region
      %182 = dma.done [#allocation5], 256
    $region37: #{tpu_custom_call.1} parent=1 // pred_fallthru
      _
    %183 = vsyncpa [#allocation4], 1
    %184 = vsyncpa [#allocation7], 1
    %185 = vsyncpa [#allocation5], 1

</llo_original>
